<compile_context>
chip_gen: v5e
topology: v5e:2x2
jax: 0.10.0
libtpu: 0.0.40
codegen_flags: <defaults>
</compile_context>

<pallas_src>
import functools

import jax
import jax.numpy as jnp
from jax import lax
from jax.experimental import pallas as pl
from jax.experimental.pallas import tpu as pltpu

BN_EPS = 1e-5
DEFAULT_TILE_N = 2048  # rows per tile; sized well inside VMEM on v5e/v6e/v7x


def _round_up(x, m):
    return (x + m - 1) // m * m


def _compiler_params():
    return pltpu.CompilerParams(
        dimension_semantics=("parallel",),          # all output blocks distinct per tile
        vmem_limit_bytes=32 * 1024 * 1024,
    )


# ---------------------------------------------------------------------------
# Kernels
# ---------------------------------------------------------------------------

def _mm_cat_stats_kernel(x_ref, wcat_ref, h1_ref, up_ref, stats_ref, *, c_mid):
    """hcat = x @ [w1 | w_up]; emit conv1 pre-activations, 'up' branch and
    per-tile partial (sum, sumsq) of the conv1 pre-activations."""
    x = x_ref[...]                                               # (TN, C_in) bf16
    hcat = jnp.dot(x, wcat_ref[...], preferred_element_type=jnp.float32)
    h1 = hcat[:, :c_mid]
    h1_ref[...] = h1
    up_ref[...] = hcat[:, c_mid:]
    s = jnp.sum(h1, axis=0, keepdims=True)                       # (1, c_mid)
    ss = jnp.sum(h1 * h1, axis=0, keepdims=True)
    stats_ref[...] = jnp.concatenate([s, ss], axis=0)[None]      # (1, 2, c_mid)


def _bn_relu_mm_stats_kernel(h_ref, scale_ref, shift_ref, w_ref,
                             hn_ref, stats_ref, *, tile_n, n_valid, need_mask):
    """a = relu(h*scale + shift) (folded BN); hn = a @ w; partial stats of hn."""
    a = jnp.maximum(h_ref[...] * scale_ref[...] + shift_ref[...], 0.0)
    if need_mask:
        # zero padded rows so they never pollute the next layer's batch stats
        row = (pl.program_id(0) * tile_n
               + lax.broadcasted_iota(jnp.int32, (tile_n, 1), 0))
        a = jnp.where(row < n_valid, a, 0.0)
    hn = jnp.dot(a.astype(jnp.bfloat16), w_ref[...],
                 preferred_element_type=jnp.float32)
    hn_ref[...] = hn
    s = jnp.sum(hn, axis=0, keepdims=True)
    ss = jnp.sum(hn * hn, axis=0, keepdims=True)
    stats_ref[...] = jnp.concatenate([s, ss], axis=0)[None]


def _bn_relu_add_kernel(h_ref, scale_ref, shift_ref, up_ref, y_ref):
    """y = relu(h*scale + shift) + up   (final BN/ReLU + transpose-conv add)."""
    a = jnp.maximum(h_ref[...] * scale_ref[...] + shift_ref[...], 0.0)
    y_ref[...] = a + up_ref[...]


# ---------------------------------------------------------------------------
# Wrapper
# ---------------------------------------------------------------------------

def _stats_to_scale_shift(stats, gamma, beta, n_valid):
    """Reduce per-tile partial sums and fold BN into a single scale/shift."""
    s = jnp.sum(stats[:, 0, :], axis=0)
    ss = jnp.sum(stats[:, 1, :], axis=0)
    mean = s / n_valid
    var = ss / n_valid - mean * mean                 # biased variance (BN train fwd)
    inv = lax.rsqrt(var + BN_EPS)
    scale = gamma.reshape(-1) * inv
    shift = beta.reshape(-1) - mean * scale
    return scale.reshape(1, -1), shift.reshape(1, -1)


def resnet_block_up_forward(x, x_skip, params, *, tile_n=DEFAULT_TILE_N):
    """x: (N, C_in) f32 features, x_skip: (N, C_skip) f32 features."""
    n, c_in = x.shape
    c_mid = params["w1"].shape[-1]
    c_out = params["w3"].shape[-1]

    tn = _round_up(min(tile_n, n), 8)
    n_pad = _round_up(n, tn)
    nt = n_pad // tn
    need_mask = n_pad != n

    x_p = jnp.pad(x, ((0, n_pad - n), (0, 0))) if n_pad != n else x
    x_bf = x_p.astype(jnp.bfloat16)

    # conv1 and the transpose-conv branch share LHS x -> one fused matmul.
    w_cat = jnp.concatenate([params["w1"], params["w_up"]], axis=1).astype(jnp.bfloat16)
    w2 = params["w2"].astype(jnp.bfloat16)
    w3 = params["w3"].astype(jnp.bfloat16)

    def row_spec(c):
        return pl.BlockSpec((tn, c), lambda i: (i, 0))

    def const_spec(shape):
        return pl.BlockSpec(shape, lambda i, _s=len(shape): (0,) * _s)

    def stats_spec(c):
        return pl.BlockSpec((1, 2, c), lambda i: (i, 0, 0))

    # ---- pass 1: fused conv1 + up matmul, partial stats of conv1 pre-acts ----
    h1, up, st1 = pl.pallas_call(
        functools.partial(_mm_cat_stats_kernel, c_mid=c_mid),
        grid=(nt,),
        in_specs=[row_spec(c_in), const_spec(w_cat.shape)],
        out_specs=(row_spec(c_mid), row_spec(c_out), stats_spec(c_mid)),
        out_shape=(
            jax.ShapeDtypeStruct((n_pad, c_mid), jnp.float32),
            jax.ShapeDtypeStruct((n_pad, c_out), jnp.float32),
            jax.ShapeDtypeStruct((nt, 2, c_mid), jnp.float32),
        ),
        compiler_params=_compiler_params(),
    )(x_bf, w_cat)

    # ---- passes 2 & 3: apply previous BN/ReLU, next matmul, partial stats ----
    def bn_mm_pass(h, stats, gamma, beta, w, c_next):
        scale, shift = _stats_to_scale_shift(stats, gamma, beta, n)
        return pl.pallas_call(
            functools.partial(_bn_relu_mm_stats_kernel, tile_n=tn,
                              n_valid=n, need_mask=need_mask),
            grid=(nt,),
            in_specs=[row_spec(h.shape[-1]),
                      const_spec(scale.shape), const_spec(shift.shape),
                      const_spec(w.shape)],
            out_specs=(row_spec(c_next), stats_spec(c_next)),
            out_shape=(jax.ShapeDtypeStruct((n_pad, c_next), jnp.float32),
                       jax.ShapeDtypeStruct((nt, 2, c_next), jnp.float32)),
            compiler_params=_compiler_params(),
        )(h, scale, shift, w)

    h2, st2 = bn_mm_pass(h1, st1, params["g1"], params["b1"], w2, c_mid)
    h3, st3 = bn_mm_pass(h2, st2, params["g2"], params["b2"], w3, c_out)

    # ---- pass 4: final BN/ReLU + residual (transpose-conv) add ----
    scale3, shift3 = _stats_to_scale_shift(st3, params["g3"], params["b3"], n)
    y = pl.pallas_call(
        _bn_relu_add_kernel,
        grid=(nt,),
        in_specs=[row_spec(c_out), const_spec(scale3.shape),
                  const_spec(shift3.shape), row_spec(c_out)],
        out_specs=row_spec(c_out),
        out_shape=jax.ShapeDtypeStruct((n_pad, c_out), jnp.float32),
        compiler_params=_compiler_params(),
    )(h3, scale3, shift3, up)

    # skip=True: ME.cat(y, x_skip) done lane-aligned in the wrapper (x_skip never
    # transits the kernel -> no masked sub-128-lane stores, no wasted DMA).
    return jnp.concatenate([y[:n], x_skip], axis=-1)


# ---------------------------------------------------------------------------
# Params / reference / demo
# ---------------------------------------------------------------------------

def init_params(key, c_in, c_mid, c_out):
    """ME conv kernels have shape (kernel_volume, Cin, Cout); we keep that shape
    and use the center tap for the dense feature-level map."""
    ks = jax.random.split(key, 8)
    k3_vol = 3 ** 3          # MinkowskiConvolution kernel_size=3, dimension=3
    k2_vol = 2 ** 3          # MinkowskiConvolutionTranspose kernel_size=2
    w1_full = 0.1 * jax.random.normal(ks[0], (k3_vol, c_in, c_mid), jnp.float32)
    w2_full = 0.1 * jax.random.normal(ks[1], (k3_vol, c_mid, c_mid), jnp.float32)
    w3_full = 0.1 * jax.random.normal(ks[2], (k3_vol, c_mid, c_out), jnp.float32)
    wup_full = 0.1 * jax.random.normal(ks[3], (k2_vol, c_in, c_out), jnp.float32)
    center = k3_vol // 2
    return {
        "w1": w1_full[center], "w2": w2_full[center], "w3": w3_full[center],
        "w_up": wup_full[0],
        "g1": 1.0 + 0.1 * jax.random.normal(ks[4], (1, c_mid), jnp.float32),
        "b1": 0.1 * jax.random.normal(ks[5], (1, c_mid), jnp.float32),
        "g2": 1.0 + 0.1 * jax.random.normal(ks[6], (1, c_mid), jnp.float32),
        "b2": 0.1 * jax.random.normal(ks[7], (1, c_mid), jnp.float32),
        "g3": jnp.ones((1, c_out), jnp.float32),
        "b3": jnp.zeros((1, c_out), jnp.float32),
    }


def _reference(x, x_skip, params):
    """Pure-JAX reference with the same dtype policy (bf16 matmul inputs,
    f32 accumulation / BN) as the kernel."""
    def mm(a, w):
        return jnp.dot(a.astype(jnp.bfloat16), w.astype(jnp.bfloat16),
                       preferred_element_type=jnp.float32)

    def bn_relu(h, g, b):
        mean = h.mean(0, keepdims=True)
        var = ((h - mean) ** 2).mean(0, keepdims=True)
        h = (h - mean) / jnp.sqrt(var + BN_EPS) * g + b
        return jnp.maximum(h, 0.0)

    h = bn_relu(mm(x, params["w1"]), params["g1"], params["b1"])
    h = bn_relu(mm(h, params["w2"]), params["g2"], params["b2"])
    h = bn_relu(mm(h, params["w3"]), params["g3"], params["b3"])
    y = mm(x, params["w_up"]) + h
    return jnp.concatenate([y, x_skip], axis=-1)


if __name__ == "__main__":
    # Small, module-consistent shapes: up_conv_nn = [32, 32, 32], 200 points
    # (not a multiple of the tile -> exercises padding + stat masking),
    # skip features with 16 channels.
    N, C_IN, C_MID, C_OUT, C_SKIP = 200, 32, 32, 32, 16

    key = jax.random.PRNGKey(0)
    kx, kskip, kp = jax.random.split(key, 3)
    x = jax.random.normal(kx, (N, C_IN), jnp.float32)
    x_skip = jax.random.normal(kskip, (N, C_SKIP), jnp.float32)
    params = init_params(kp, C_IN, C_MID, C_OUT)

    out = resnet_block_up_forward(x, x_skip, params, tile_n=128)
    out = jax.block_until_ready(out)

    ref = _reference(x, x_skip, params)
    assert out.shape == (N, C_OUT + C_SKIP), out.shape
    max_err = float(jnp.max(jnp.abs(out - ref)))
    assert jnp.allclose(out, ref, atol=5e-3, rtol=5e-3), max_err

    print("KERNEL_OK")
</pallas_src>

<mosaic_0001>
module attributes {stable_mosaic.version = 11 : i64} {
  func.func @_mm_cat_stats_kernel(%arg0: i32, %arg1: memref<128x32xbf16, #tpu.memory_space<vmem>>, %arg2: memref<32x64xbf16, #tpu.memory_space<vmem>>, %arg3: memref<128x32xf32, #tpu.memory_space<vmem>>, %arg4: memref<128x32xf32, #tpu.memory_space<vmem>>, %arg5: memref<1x2x32xf32, #tpu.memory_space<vmem>>) attributes {dimension_semantics = [#tpu.dimension_semantics<parallel>], iteration_bounds = array<i64: 2>, scalar_prefetch = 0 : i64, scratch_operands = 0 : i64, tpu.core_type = #tpu.core_type<tc>, window_params = [{transform_indices = @transform_0, window_bounds = array<i64: 128, 32>}, {pipeline_mode = #tpu.pipeline_mode<synchronous>, transform_indices = @transform_1, window_bounds = array<i64: 32, 64>}, {transform_indices = @transform_2, window_bounds = array<i64: 128, 32>}, {transform_indices = @transform_3, window_bounds = array<i64: 128, 32>}, {transform_indices = @transform_4, window_bounds = array<i64: 1, 2, 32>}]} {
    %c0 = arith.constant 0 : index
    %c0_0 = arith.constant 0 : index
    %0 = vector.load %arg1[%c0, %c0_0] : memref<128x32xbf16, #tpu.memory_space<vmem>>, vector<128x32xbf16>
    %c0_1 = arith.constant 0 : index
    %c0_2 = arith.constant 0 : index
    %1 = vector.load %arg2[%c0_1, %c0_2] : memref<32x64xbf16, #tpu.memory_space<vmem>>, vector<32x64xbf16>
    %cst = arith.constant dense<0.000000e+00> : vector<128x64xf32>
    %2 = tpu.matmul %0, %1, %cst {dimension_numbers = #tpu.dot_dimension_numbers<[1], [0], [0], [1], [0, 0, 1, 1], [], []>} : vector<128x32xbf16>, vector<32x64xbf16>, vector<128x64xf32> -> vector<128x64xf32>
    %3 = vector.extract_strided_slice %2 {offsets = [0, 0], sizes = [128, 32], strides = [1, 1]} : vector<128x64xf32> to vector<128x32xf32>
    %c0_3 = arith.constant 0 : index
    %c0_4 = arith.constant 0 : index
    %4 = vector.load %arg3[%c0_3, %c0_4] : memref<128x32xf32, #tpu.memory_space<vmem>>, vector<128x32xf32>
    tpu.vector_store %arg3[%c0_3, %c0_4], %3 {strides = array<i32>} : memref<128x32xf32, #tpu.memory_space<vmem>>, vector<128x32xf32>,
    %5 = vector.extract_strided_slice %2 {offsets = [0, 32], sizes = [128, 32], strides = [1, 1]} : vector<128x64xf32> to vector<128x32xf32>
    %c0_5 = arith.constant 0 : index
    %c0_6 = arith.constant 0 : index
    %6 = vector.load %arg4[%c0_5, %c0_6] : memref<128x32xf32, #tpu.memory_space<vmem>>, vector<128x32xf32>
    tpu.vector_store %arg4[%c0_5, %c0_6], %5 {strides = array<i32>} : memref<128x32xf32, #tpu.memory_space<vmem>>, vector<128x32xf32>,
    %cst_7 = arith.constant dense<0.000000e+00> : vector<32xf32>
    %7 = vector.multi_reduction <add>, %3, %cst_7 [0] : vector<128x32xf32> to vector<32xf32>
    %8 = vector.shape_cast %7 : vector<32xf32> to vector<1x32xf32>
    %9 = arith.mulf %3, %3 : vector<128x32xf32>
    %cst_8 = arith.constant dense<0.000000e+00> : vector<32xf32>
    %10 = vector.multi_reduction <add>, %9, %cst_8 [0] : vector<128x32xf32> to vector<32xf32>
    %11 = vector.shape_cast %10 : vector<32xf32> to vector<1x32xf32>
    %12 = tpu.concatenate %8, %11 in 0 : vector<1x32xf32>, vector<1x32xf32> -> vector<2x32xf32>
    %13 = vector.shape_cast %12 : vector<2x32xf32> to vector<1x2x32xf32>
    %c0_9 = arith.constant 0 : index
    %c0_10 = arith.constant 0 : index
    %c0_11 = arith.constant 0 : index
    %14 = vector.load %arg5[%c0_9, %c0_10, %c0_11] : memref<1x2x32xf32, #tpu.memory_space<vmem>>, vector<1x2x32xf32>
    tpu.vector_store %arg5[%c0_9, %c0_10, %c0_11], %13 {strides = array<i32>} : memref<1x2x32xf32, #tpu.memory_space<vmem>>, vector<1x2x32xf32>,
    return
  }
  func.func @transform_0(%arg0: i32) -> (i32, i32) {
    %c0_i32 = arith.constant 0 : i32
    %c0_i32_0 = arith.constant 0 : i32
    return %arg0, %c0_i32 : i32, i32
  }
  func.func @transform_1(%arg0: i32) -> (i32, i32) {
    %c0_i32 = arith.constant 0 : i32
    %c0_i32_0 = arith.constant 0 : i32
    %c0_i32_1 = arith.constant 0 : i32
    return %c0_i32, %c0_i32_0 : i32, i32
  }
  func.func @transform_2(%arg0: i32) -> (i32, i32) {
    %c0_i32 = arith.constant 0 : i32
    %c0_i32_0 = arith.constant 0 : i32
    return %arg0, %c0_i32 : i32, i32
  }
  func.func @transform_3(%arg0: i32) -> (i32, i32) {
    %c0_i32 = arith.constant 0 : i32
    %c0_i32_0 = arith.constant 0 : i32
    return %arg0, %c0_i32 : i32, i32
  }
  func.func @transform_4(%arg0: i32) -> (i32, i32, i32) {
    %c0_i32 = arith.constant 0 : i32
    %c0_i32_0 = arith.constant 0 : i32
    %c0_i32_1 = arith.constant 0 : i32
    return %arg0, %c0_i32, %c0_i32_0 : i32, i32, i32
  }
}

</mosaic_0001>

<llo_original>
// kernel: tpu_custom_call.1
$region0: #{tpu_custom_call.1}
  #allocation0 [shape = 'u32[]', space=smem, size = 0x4, offset = 0x4, fixed_abs, tag = 'smem constant byte address 0x4 - core index']
  #allocation1 [shape = 'u32[72,128]{1,0:T(1,128)}', space=vmem, size = 0x9000, scoped, tag = 'internal scratch']
  %s0 = inlined_call_operand.vmem [shape: bf16[256,32], index: 0, kind: input, shape index: {}]
  %s1 = inlined_call_operand.vmem [shape: bf16[32,64], index: 1, kind: input, shape index: {}]
  %s2 = inlined_call_operand.vmem [shape: f32[256,32], index: 2, kind: output, shape index: {0}]
  %s3 = inlined_call_operand.vmem [shape: f32[256,32], index: 3, kind: output, shape index: {1}]
  %s4 = inlined_call_operand.hbm [shape: f32[2,2,32], index: 4, kind: output, shape index: {2}]
  %5 = xla_tuple %s2, %s3, %s4
  %s6 = sld [smem:[#allocation0]]
  $region57: #{tpu_custom_call.1} parent=0
    _
  %s8 = ssub.s32 1, %s6
  %s9 = scalar_select 0, %s8, %s6
  $region1: #{tpu_custom_call.1} parent=0
    #allocation2 [shape = 'u8[2048]{0}', space=vmem, size = 0x800, scoped, tag = 'output window, operand 2']
    #allocation3 [shape = 's32[2]{0}', space=sflag, size = 0x8, scoped, tag = 'scoped memory for tpu_custom_call.1']
    %10 = vsyncpa [#allocation3], 0
    %s11 = scalar_lea.sflag [#allocation3], 1
    %12 = vsyncpa %s11, 0
    loop: start=0, step=1, limit=4
    $region2: #{tpu_custom_call.1} parent=1 // loop_pre_header
      _
    $region3: #{tpu_custom_call.1} parent=1 // loop_header
      %s14 = sphi 0, %s18
      %p15 = scmp.ge.s32.totalorder %s14, 4
      %s24 = sphi 0, %s26
      %s27 = sphi 0, %s24
      %s28 = sphi 0, %s27
      %s44 = sphi 0, %s28
      %s48 = sphi 0, %s48
      %s50 = sphi 0, %s48
      %s51 = sphi 0, %s50
      %s65 = sphi 0, %s51
      %s71 = sphi 0, %s73
      %s74 = sphi 0, %s71
      %s75 = sphi 0, %s74
      %s91 = sphi 0, %s75
      %s97 = sphi 0, %s99
      %s100 = sphi 0, %s97
      %s101 = sphi 0, %s100
      %s117 = sphi 0, %s101
      %s123 = sphi 0, %s125
      %s126 = sphi 0, %s123
      %s127 = sphi 0, %s126
      %s143 = sphi 0, %s127
    $region4: #{tpu_custom_call.1} parent=1 // loop_header_branch
      %17 = sbr.rel (%p15) target = $region8
    $region5: #{tpu_custom_call.1} parent=1 // loop_body
      %s19 = ssub.s32 %s14, 1
      %s20 = ssub.s32 %s14, 2
      %s21 = sadd.s32 %s14, 1
      %s22 = ssub.s32 %s14, %s21
      %p23 = scmp.eq.s32.totalorder %s22, 0
      %s25 = sadd.s32 %s24, 1
      %s26 = scalar_select %p23, %s24, %s25
      %p29 = pneg %p23
      %p30 = scmp.eq.s32.totalorder %s14, 1
      %p31 = por %p29, %p30
      %p32 = scmp.ne.s32.totalorder %s24, %s27
      %p33 = scmp.eq.s32.totalorder %s14, 0
      %p34 = por %p32, %p33
      %p35 = scmp.ne.s32.totalorder %s24, %s27
      %p36 = scmp.eq.s32.totalorder %s19, 1
      %p37 = por %p35, %p36
      %p38 = scmp.ne.s32.totalorder %s27, %s28
      %p39 = scmp.eq.s32.totalorder %s19, 0
      %p40 = por %p38, %p39
      %p41 = scmp.ne.s32.totalorder %s27, %s28
      %p42 = scmp.eq.s32.totalorder %s20, 1
      %p43 = por %p41, %p42
      %p45 = scmp.ne.s32.totalorder %s28, %s44
      %p46 = scmp.eq.s32.totalorder %s20, 0
      %p47 = por %p45, %p46
      %s49 = sadd.s32 %s48, 1
      %p52 = scmp.eq.s32.totalorder %s14, 1
      %p53 = scmp.ne.s32.totalorder %s48, %s50
      %p54 = scmp.eq.s32.totalorder %s14, 0
      %p55 = por %p53, %p54
      %p56 = scmp.ne.s32.totalorder %s48, %s50
      %p57 = scmp.eq.s32.totalorder %s19, 1
      %p58 = por %p56, %p57
      %p59 = scmp.ne.s32.totalorder %s50, %s51
      %p60 = scmp.eq.s32.totalorder %s19, 0
      %p61 = por %p59, %p60
      %p62 = scmp.ne.s32.totalorder %s50, %s51
      %p63 = scmp.eq.s32.totalorder %s20, 1
      %p64 = por %p62, %p63
      %p66 = scmp.ne.s32.totalorder %s51, %s65
      %p67 = scmp.eq.s32.totalorder %s20, 0
      %p68 = por %p66, %p67
      %s69 = ssub.s32 %s14, %s21
      %p70 = scmp.eq.s32.totalorder %s69, 0
      %s72 = sadd.s32 %s71, 1
      %s73 = scalar_select %p70, %s71, %s72
      %p76 = pneg %p70
      %p77 = scmp.eq.s32.totalorder %s14, 1
      %p78 = por %p76, %p77
      %p79 = scmp.ne.s32.totalorder %s71, %s74
      %p80 = scmp.eq.s32.totalorder %s14, 0
      %p81 = por %p79, %p80
      %p82 = scmp.ne.s32.totalorder %s71, %s74
      %p83 = scmp.eq.s32.totalorder %s19, 1
      %p84 = por %p82, %p83
      %p85 = scmp.ne.s32.totalorder %s74, %s75
      %p86 = scmp.eq.s32.totalorder %s19, 0
      %p87 = por %p85, %p86
      %p88 = scmp.ne.s32.totalorder %s74, %s75
      %p89 = scmp.eq.s32.totalorder %s20, 1
      %p90 = por %p88, %p89
      %p92 = scmp.ne.s32.totalorder %s75, %s91
      %p93 = scmp.eq.s32.totalorder %s20, 0
      %p94 = por %p92, %p93
      %s95 = ssub.s32 %s14, %s21
      %p96 = scmp.eq.s32.totalorder %s95, 0
      %s98 = sadd.s32 %s97, 1
      %s99 = scalar_select %p96, %s97, %s98
      %p102 = pneg %p96
      %p103 = scmp.eq.s32.totalorder %s14, 1
      %p104 = por %p102, %p103
      %p105 = scmp.ne.s32.totalorder %s97, %s100
      %p106 = scmp.eq.s32.totalorder %s14, 0
      %p107 = por %p105, %p106
      %p108 = scmp.ne.s32.totalorder %s97, %s100
      %p109 = scmp.eq.s32.totalorder %s19, 1
      %p110 = por %p108, %p109
      %p111 = scmp.ne.s32.totalorder %s100, %s101
      %p112 = scmp.eq.s32.totalorder %s19, 0
      %p113 = por %p111, %p112
      %p114 = scmp.ne.s32.totalorder %s100, %s101
      %p115 = scmp.eq.s32.totalorder %s20, 1
      %p116 = por %p114, %p115
      %p118 = scmp.ne.s32.totalorder %s101, %s117
      %p119 = scmp.eq.s32.totalorder %s20, 0
      %p120 = por %p118, %p119
      %s121 = ssub.s32 %s14, %s21
      %p122 = scmp.eq.s32.totalorder %s121, 0
      %s124 = sadd.s32 %s123, 1
      %s125 = scalar_select %p122, %s123, %s124
      %p128 = pneg %p122
      %p129 = scmp.eq.s32.totalorder %s14, 1
      %p130 = por %p128, %p129
      %p131 = scmp.ne.s32.totalorder %s123, %s126
      %p132 = scmp.eq.s32.totalorder %s14, 0
      %p133 = por %p131, %p132
      %p134 = scmp.ne.s32.totalorder %s123, %s126
      %p135 = scmp.eq.s32.totalorder %s19, 1
      %p136 = por %p134, %p135
      %p137 = scmp.ne.s32.totalorder %s126, %s127
      %p138 = scmp.eq.s32.totalorder %s19, 0
      %p139 = por %p137, %p138
      %p140 = scmp.ne.s32.totalorder %s126, %s127
      %p141 = scmp.eq.s32.totalorder %s20, 1
      %p142 = por %p140, %p141
      %p144 = scmp.ne.s32.totalorder %s127, %s143
      %p145 = scmp.eq.s32.totalorder %s20, 0
      %p146 = por %p144, %p145
      %p147 = scmp.le.s32.totalorder 1, %s14
      %p148 = scmp.lt.s32.totalorder %s14, 3
      %p149 = pnand %p147, %p148
      %p150 = pneg %p149
      // Predicated region
      $region9: #{tpu_custom_call.1} parent=5 // pred_check
        _
      $region10: #{tpu_custom_call.1} parent=5 // pred_check_branch
        %152 = sbr.rel (%p149) target = $region12
      $region11: #{tpu_custom_call.1} parent=5 // pred_region
        %s153 = ssub.s32 %s14, 1
        // Predicated region
        $region13: #{tpu_custom_call.1} parent=11 // pred_check
          %p154 = pneg %p61
        $region14: #{tpu_custom_call.1} parent=11 // pred_check_branch
          %156 = sbr.rel (%p154) target = $region16
        $region15: #{tpu_custom_call.1} parent=11 // pred_region
          _
        $region16: #{tpu_custom_call.1} parent=11 // pred_fallthru
          _
      $region12: #{tpu_custom_call.1} parent=5 // pred_fallthru
        _
      %p157 = scmp.lt.s32.totalorder %s14, 2
      // Predicated region
      $region17: #{tpu_custom_call.1} parent=5 // pred_check
        %p158 = pneg %p157
      $region18: #{tpu_custom_call.1} parent=5 // pred_check_branch
        %160 = sbr.rel (%p158) target = $region20
      $region19: #{tpu_custom_call.1} parent=5 // pred_region
        // Predicated region
        $region21: #{tpu_custom_call.1} parent=19 // pred_check
          %p161 = pneg %p34
        $region22: #{tpu_custom_call.1} parent=19 // pred_check_branch
          %163 = sbr.rel (%p161) target = $region24
        $region23: #{tpu_custom_call.1} parent=19 // pred_region
          %s164 = smul.u32 16, %s14
          %p165 = scmp.lt.s32.totalorder %s164, 31
          %s166 = scalar_select %p165, %s164, 31
          %s167 = smul.addr %s166, 4
          %s168 = scalar_lea.vmem %s0, %s167
          %s169 = smul.u32 16, %s14
        $region24: #{tpu_custom_call.1} parent=19 // pred_fallthru
          _
      $region20: #{tpu_custom_call.1} parent=5 // pred_fallthru
        _
      %p170 = scmp.le.s32.totalorder 1, %s14
      %p171 = scmp.lt.s32.totalorder %s14, 3
      %p172 = pnand %p170, %p171
      %p173 = pneg %p172
      // Predicated region
      $region25: #{tpu_custom_call.1} parent=5 // pred_check
        _
      $region26: #{tpu_custom_call.1} parent=5 // pred_check_branch
        %175 = sbr.rel (%p172) target = $region28
      $region27: #{tpu_custom_call.1} parent=5 // pred_region
        %s176 = ssub.s32 %s14, 1
        %s177 = smul.u32 16, %s19
        %p178 = scmp.lt.s32.totalorder %s177, 31
        %s179 = scalar_select %p178, %s177, 31
        %s180 = smul.addr %s179, 4
        %s181 = scalar_lea.vmem %s0, %s180
        %p182 = pneg %p40
        %p183 = pneg %p37
        %p184 = pneg %p61
        %p185 = pneg %p58
        %p186 = pneg %p87
        %p187 = pneg %p84
        %s188 = smul.u32 16, %s19
        %p189 = scmp.lt.s32.totalorder %s188, 31
        %s190 = scalar_select %p189, %s188, 31
        %s191 = smul.addr %s190, 8
        %s192 = scalar_lea.vmem %s2, %s191
        %p193 = pneg %p113
        %p194 = pneg %p110
        %s195 = smul.u32 16, %s19
        %p196 = scmp.lt.s32.totalorder %s195, 31
        %s197 = scalar_select %p196, %s195, 31
        %s198 = smul.addr %s197, 8
        %s199 = scalar_lea.vmem %s3, %s198
        %p200 = pneg %p139
        %p201 = pneg %p136
        %s202 = sand.u32 %s126, 1
        %s203 = scalar_lea.sflag [#allocation3], %s202
        %s204 = sand.u32 %s126, 1
        %s205 = smul.addr %s204, 2
        %s206 = scalar_lea.vmem [#allocation2], %s205
        %s207 = smul.u32 16, %s19
        %p208 = scmp.lt.s32.totalorder %s207, 31
        %s209 = scalar_select %p208, %s207, 31
        %s210 = smul.addr %s209, 4
        %s211 = scalar_lea.vmem %s0, %s210
        %s212 = smul.u32 16, %s19
        %s213 = smul.u32 16, %s19
        %p214 = scmp.lt.s32.totalorder %s213, 31
        %s215 = scalar_select %p214, %s213, 31
        %s216 = smul.addr %s215, 8
        %s217 = scalar_lea.vmem %s2, %s216
        %s218 = smul.u32 16, %s19
        %s219 = smul.u32 16, %s19
        %p220 = scmp.lt.s32.totalorder %s219, 31
        %s221 = scalar_select %p220, %s219, 31
        %s222 = smul.addr %s221, 8
        %s223 = scalar_lea.vmem %s3, %s222
        %s224 = smul.u32 16, %s19
        %v226 = vld [vmem:[%s211] sm:$0xf]
        %v227 = vld [vmem:[%s211 + $0x4] sm:$0xf]
        %v228 = vld [vmem:[%s211 + $0x8] sm:$0xf]
        %v229 = vld [vmem:[%s211 + $0xc] sm:$0xf]
        %v230 = vld [vmem:[%s211 + $0x10] sm:$0xf]
        %v231 = vld [vmem:[%s211 + $0x14] sm:$0xf]
        %v232 = vld [vmem:[%s211 + $0x18] sm:$0xf]
        %v233 = vld [vmem:[%s211 + $0x1c] sm:$0xf]
        %v234 = vld [vmem:[%s211 + $0x20] sm:$0xf]
        %v235 = vld [vmem:[%s211 + $0x24] sm:$0xf]
        %v236 = vld [vmem:[%s211 + $0x28] sm:$0xf]
        %v237 = vld [vmem:[%s211 + $0x2c] sm:$0xf]
        %v238 = vld [vmem:[%s211 + $0x30] sm:$0xf]
        %v239 = vld [vmem:[%s211 + $0x34] sm:$0xf]
        %v240 = vld [vmem:[%s211 + $0x38] sm:$0xf]
        %v241 = vld [vmem:[%s211 + $0x3c] sm:$0xf]
        %v242 = vld [vmem:[%s1] sm:$0xf]
        %v243 = vld [vmem:[%s1 + $0x4] sm:$0xf]
        %v244 = vld [vmem:[%s1 + $0x8] sm:$0xf]
        %v245 = vld [vmem:[%s1 + $0xc] sm:$0xf]
        %v262 = vunpack.c.l.b16 %v226
        %v263 = vunpack.c.l.b16 %v227
        %v264 = vunpack.c.l.b16 %v228
        %v265 = vunpack.c.l.b16 %v229
        %v266 = vunpack.c.l.b16 %v230
        %v267 = vunpack.c.l.b16 %v231
        %v268 = vunpack.c.l.b16 %v232
        %v269 = vunpack.c.l.b16 %v233
        %v270 = vunpack.c.l.b16 %v234
        %v271 = vunpack.c.l.b16 %v235
        %v272 = vunpack.c.l.b16 %v236
        %v273 = vunpack.c.l.b16 %v237
        %v274 = vunpack.c.l.b16 %v238
        %v275 = vunpack.c.l.b16 %v239
        %v276 = vunpack.c.l.b16 %v240
        %v277 = vunpack.c.l.b16 %v241
        %v278 = vpack.c.b16 %v263, %v262
        %v279 = vpack.c.b16 %v265, %v264
        %v280 = vpack.c.b16 %v267, %v266
        %v281 = vpack.c.b16 %v269, %v268
        %v282 = vpack.c.b16 %v271, %v270
        %v283 = vpack.c.b16 %v273, %v272
        %v284 = vpack.c.b16 %v275, %v274
        %v285 = vpack.c.b16 %v277, %v276
        %v290 = vunpack.c.l.b16 %v242
        %v291 = vunpack.c.l.b16 %v243
        %v292 = vunpack.c.l.b16 %v244
        %v293 = vunpack.c.l.b16 %v245
        %v294 = vpack.c.b16 %v291, %v290
        %v295 = vpack.c.b16 %v293, %v292
        %vm298 = vcmask 261120
        %v300 = vsel %vm298, %v278, 0
        %v303 = vsel %vm298, %v279, 0
        %v306 = vsel %vm298, %v280, 0
        %v309 = vsel %vm298, %v281, 0
        %v312 = vsel %vm298, %v282, 0
        %v315 = vsel %vm298, %v283, 0
        %v318 = vsel %vm298, %v284, 0
        %v321 = vsel %vm298, %v285, 0
        %323 = vmatpush.bf16.msra.mxu0 0
        %324 = vmatpush.bf16.msra.mxu0 0
        %325 = vmatpush.bf16.msra.mxu0 0
        %326 = vmatpush.bf16.msra.mxu0 0
        %327 = vmatpush.bf16.msra.mxu0 0
        %328 = vmatpush.bf16.msra.mxu0 0
        %329 = vmatpush.bf16.msra.mxu0 %v295
        %330 = vmatpush.bf16.msra.mxu0 %v294
        %331 = vmatmul.bf16.gmra.mxu0 %v300
        %v332 = vpop.f32.mrf.mxu0
        %v333 = vadd.f32 0.0, %v332
        %v334 = vpop.f32.mrf.mxu0
        %v335 = vadd.f32 0.0, %v334
        %336 = vmatmul.bf16.gmra.mxu0 %v303
        %v337 = vpop.f32.mrf.mxu0
        %v338 = vadd.f32 0.0, %v337
        %v339 = vpop.f32.mrf.mxu0
        %v340 = vadd.f32 0.0, %v339
        %341 = vmatmul.bf16.gmra.mxu0 %v306
        %v342 = vpop.f32.mrf.mxu0
        %v343 = vadd.f32 0.0, %v342
        %v344 = vpop.f32.mrf.mxu0
        %v345 = vadd.f32 0.0, %v344
        %346 = vmatmul.bf16.gmra.mxu0 %v309
        %v347 = vpop.f32.mrf.mxu0
        %v348 = vadd.f32 0.0, %v347
        %v349 = vpop.f32.mrf.mxu0
        %v350 = vadd.f32 0.0, %v349
        %351 = vmatmul.bf16.gmra.mxu0 %v312
        %v352 = vpop.f32.mrf.mxu0
        %v353 = vadd.f32 0.0, %v352
        %v354 = vpop.f32.mrf.mxu0
        %v355 = vadd.f32 0.0, %v354
        %356 = vmatmul.bf16.gmra.mxu0 %v315
        %v357 = vpop.f32.mrf.mxu0
        %v358 = vadd.f32 0.0, %v357
        %v359 = vpop.f32.mrf.mxu0
        %v360 = vadd.f32 0.0, %v359
        %361 = vmatmul.bf16.gmra.mxu0 %v318
        %v362 = vpop.f32.mrf.mxu0
        %v363 = vadd.f32 0.0, %v362
        %v364 = vpop.f32.mrf.mxu0
        %v365 = vadd.f32 0.0, %v364
        %366 = vmatmul.bf16.gmra.mxu0 %v321
        %v367 = vpop.f32.mrf.mxu0
        %v368 = vadd.f32 0.0, %v367
        %v369 = vpop.f32.mrf.mxu0
        %v370 = vadd.f32 0.0, %v369
        %371 = vdwg.mxu0
        %372 = vst.msk [vmem:[%s217] sm:$0xff] %vm298, %v333
        %373 = vst.msk [vmem:[%s217 + $0x8] sm:$0xff] %vm298, %v335
        %374 = vst.msk [vmem:[%s217 + $0x10] sm:$0xff] %vm298, %v338
        %375 = vst.msk [vmem:[%s217 + $0x18] sm:$0xff] %vm298, %v340
        %376 = vst.msk [vmem:[%s217 + $0x20] sm:$0xff] %vm298, %v343
        %377 = vst.msk [vmem:[%s217 + $0x28] sm:$0xff] %vm298, %v345
        %378 = vst.msk [vmem:[%s217 + $0x30] sm:$0xff] %vm298, %v348
        %379 = vst.msk [vmem:[%s217 + $0x38] sm:$0xff] %vm298, %v350
        %380 = vst.msk [vmem:[%s217 + $0x40] sm:$0xff] %vm298, %v353
        %381 = vst.msk [vmem:[%s217 + $0x48] sm:$0xff] %vm298, %v355
        %382 = vst.msk [vmem:[%s217 + $0x50] sm:$0xff] %vm298, %v358
        %383 = vst.msk [vmem:[%s217 + $0x58] sm:$0xff] %vm298, %v360
        %384 = vst.msk [vmem:[%s217 + $0x60] sm:$0xff] %vm298, %v363
        %385 = vst.msk [vmem:[%s217 + $0x68] sm:$0xff] %vm298, %v365
        %386 = vst.msk [vmem:[%s217 + $0x70] sm:$0xff] %vm298, %v368
        %387 = vst.msk [vmem:[%s217 + $0x78] sm:$0xff] %vm298, %v370
        %404 = vrot.lane.b32.xlu0 %v333, 96
        %v405 = vpop.permute.xlu0 %404
        %406 = vrot.lane.b32.xlu0 %v335, 96
        %v407 = vpop.permute.xlu0 %406
        %408 = vrot.lane.b32.xlu0 %v338, 96
        %v409 = vpop.permute.xlu0 %408
        %410 = vrot.lane.b32.xlu0 %v340, 96
        %v411 = vpop.permute.xlu0 %410
        %412 = vrot.lane.b32.xlu0 %v343, 96
        %v413 = vpop.permute.xlu0 %412
        %414 = vrot.lane.b32.xlu0 %v345, 96
        %v415 = vpop.permute.xlu0 %414
        %416 = vrot.lane.b32.xlu0 %v348, 96
        %v417 = vpop.permute.xlu0 %416
        %418 = vrot.lane.b32.xlu0 %v350, 96
        %v419 = vpop.permute.xlu0 %418
        %420 = vrot.lane.b32.xlu0 %v353, 96
        %v421 = vpop.permute.xlu0 %420
        %422 = vrot.lane.b32.xlu0 %v355, 96
        %v423 = vpop.permute.xlu0 %422
        %424 = vrot.lane.b32.xlu0 %v358, 96
        %v425 = vpop.permute.xlu0 %424
        %426 = vrot.lane.b32.xlu0 %v360, 96
        %v427 = vpop.permute.xlu0 %426
        %428 = vrot.lane.b32.xlu0 %v363, 96
        %v429 = vpop.permute.xlu0 %428
        %430 = vrot.lane.b32.xlu0 %v365, 96
        %v431 = vpop.permute.xlu0 %430
        %432 = vrot.lane.b32.xlu0 %v368, 96
        %v433 = vpop.permute.xlu0 %432
        %434 = vrot.lane.b32.xlu0 %v370, 96
        %v435 = vpop.permute.xlu0 %434
        %452 = vst.msk [vmem:[%s223] sm:$0xff] %vm298, %v405
        %453 = vst.msk [vmem:[%s223 + $0x8] sm:$0xff] %vm298, %v407
        %454 = vst.msk [vmem:[%s223 + $0x10] sm:$0xff] %vm298, %v409
        %455 = vst.msk [vmem:[%s223 + $0x18] sm:$0xff] %vm298, %v411
        %456 = vst.msk [vmem:[%s223 + $0x20] sm:$0xff] %vm298, %v413
        %457 = vst.msk [vmem:[%s223 + $0x28] sm:$0xff] %vm298, %v415
        %458 = vst.msk [vmem:[%s223 + $0x30] sm:$0xff] %vm298, %v417
        %459 = vst.msk [vmem:[%s223 + $0x38] sm:$0xff] %vm298, %v419
        %460 = vst.msk [vmem:[%s223 + $0x40] sm:$0xff] %vm298, %v421
        %461 = vst.msk [vmem:[%s223 + $0x48] sm:$0xff] %vm298, %v423
        %462 = vst.msk [vmem:[%s223 + $0x50] sm:$0xff] %vm298, %v425
        %463 = vst.msk [vmem:[%s223 + $0x58] sm:$0xff] %vm298, %v427
        %464 = vst.msk [vmem:[%s223 + $0x60] sm:$0xff] %vm298, %v429
        %465 = vst.msk [vmem:[%s223 + $0x68] sm:$0xff] %vm298, %v431
        %466 = vst.msk [vmem:[%s223 + $0x70] sm:$0xff] %vm298, %v433
        %467 = vst.msk [vmem:[%s223 + $0x78] sm:$0xff] %vm298, %v435
        %v468 = vsel %vm298, %v333, 0.0
        %v469 = vsel %vm298, %v335, 0.0
        %v470 = vadd.f32 %v468, %v469
        %v471 = vsel %vm298, %v338, 0.0
        %v472 = vadd.f32 %v470, %v471
        %v473 = vsel %vm298, %v340, 0.0
        %v474 = vadd.f32 %v472, %v473
        %v475 = vsel %vm298, %v343, 0.0
        %v476 = vadd.f32 %v474, %v475
        %v477 = vsel %vm298, %v345, 0.0
        %v478 = vadd.f32 %v476, %v477
        %v479 = vsel %vm298, %v348, 0.0
        %v480 = vadd.f32 %v478, %v479
        %v481 = vsel %vm298, %v350, 0.0
        %v482 = vadd.f32 %v480, %v481
        %v483 = vsel %vm298, %v353, 0.0
        %v484 = vadd.f32 %v482, %v483
        %v485 = vsel %vm298, %v355, 0.0
        %v486 = vadd.f32 %v484, %v485
        %v487 = vsel %vm298, %v358, 0.0
        %v488 = vadd.f32 %v486, %v487
        %v489 = vsel %vm298, %v360, 0.0
        %v490 = vadd.f32 %v488, %v489
        %v491 = vsel %vm298, %v363, 0.0
        %v492 = vadd.f32 %v490, %v491
        %v493 = vsel %vm298, %v365, 0.0
        %v494 = vadd.f32 %v492, %v493
        %v495 = vsel %vm298, %v368, 0.0
        %v496 = vadd.f32 %v494, %v495
        %v497 = vsel %vm298, %v370, 0.0
        %v498 = vadd.f32 %v496, %v497
        %v499 = vrot.slane %v498, 4
        %v500 = vadd.f32 %v498, %v499
        %v501 = vrot.slane %v500, 2
        %v502 = vadd.f32 %v500, %v501
        %v503 = vrot.slane %v502, 1
        %v504 = vadd.f32 %v502, %v503
        %v505 = vmul.f32 %v333, %v333
        %v506 = vmul.f32 %v335, %v335
        %v507 = vmul.f32 %v338, %v338
        %v508 = vmul.f32 %v340, %v340
        %v509 = vmul.f32 %v343, %v343
        %v510 = vmul.f32 %v345, %v345
        %v511 = vmul.f32 %v348, %v348
        %v512 = vmul.f32 %v350, %v350
        %v513 = vmul.f32 %v353, %v353
        %v514 = vmul.f32 %v355, %v355
        %v515 = vmul.f32 %v358, %v358
        %v516 = vmul.f32 %v360, %v360
        %v517 = vmul.f32 %v363, %v363
        %v518 = vmul.f32 %v365, %v365
        %v519 = vmul.f32 %v368, %v368
        %v520 = vmul.f32 %v370, %v370
        %v521 = vsel %vm298, %v505, 0.0
        %v522 = vsel %vm298, %v506, 0.0
        %v523 = vadd.f32 %v521, %v522
        %v524 = vsel %vm298, %v507, 0.0
        %v525 = vadd.f32 %v523, %v524
        %v526 = vsel %vm298, %v508, 0.0
        %v527 = vadd.f32 %v525, %v526
        %v528 = vsel %vm298, %v509, 0.0
        %v529 = vadd.f32 %v527, %v528
        %v530 = vsel %vm298, %v510, 0.0
        %v531 = vadd.f32 %v529, %v530
        %v532 = vsel %vm298, %v511, 0.0
        %v533 = vadd.f32 %v531, %v532
        %v534 = vsel %vm298, %v512, 0.0
        %v535 = vadd.f32 %v533, %v534
        %v536 = vsel %vm298, %v513, 0.0
        %v537 = vadd.f32 %v535, %v536
        %v538 = vsel %vm298, %v514, 0.0
        %v539 = vadd.f32 %v537, %v538
        %v540 = vsel %vm298, %v515, 0.0
        %v541 = vadd.f32 %v539, %v540
        %v542 = vsel %vm298, %v516, 0.0
        %v543 = vadd.f32 %v541, %v542
        %v544 = vsel %vm298, %v517, 0.0
        %v545 = vadd.f32 %v543, %v544
        %v546 = vsel %vm298, %v518, 0.0
        %v547 = vadd.f32 %v545, %v546
        %v548 = vsel %vm298, %v519, 0.0
        %v549 = vadd.f32 %v547, %v548
        %v550 = vsel %vm298, %v520, 0.0
        %v551 = vadd.f32 %v549, %v550
        %v552 = vrot.slane %v551, 4
        %v553 = vadd.f32 %v551, %v552
        %v554 = vrot.slane %v553, 2
        %v555 = vadd.f32 %v553, %v554
        %v556 = vrot.slane %v555, 1
        %v557 = vadd.f32 %v555, %v556
        %vm558 = vcmask 1040384
        %v559 = vsel %vm558, %v504, %v557
        %vm560 = vcmask 254976
        %561 = vst.msk [vmem:[%s206] sm:$0x3] %vm560, %v559
        %s562 = smul.u32 16, %s19
        %p563 = scmp.lt.s32.totalorder %s562, 31
        %s564 = scalar_select %p563, %s562, 31
        %s565 = smul.addr %s564, 8
        %s566 = scalar_lea.vmem %s2, %s565
        %s567 = smul.u32 16, %s19
        %p568 = scmp.lt.s32.totalorder %s567, 31
        %s569 = scalar_select %p568, %s567, 31
        %s570 = smul.addr %s569, 8
        %s571 = scalar_lea.vmem %s3, %s570
        %s572 = sand.u32 %s126, 1
        %s573 = scalar_lea.sflag [#allocation3], %s572
        %s574 = sand.u32 %s126, 1
        %s575 = smul.addr %s574, 2
        %s576 = scalar_lea.vmem [#allocation2], %s575
        // Predicated region
        $region29: #{tpu_custom_call.1} parent=27 // pred_check
          %p577 = pneg %p84
        $region30: #{tpu_custom_call.1} parent=27 // pred_check_branch
          %579 = sbr.rel (%p577) target = $region32
        $region31: #{tpu_custom_call.1} parent=27 // pred_region
          %s580 = smul.u32 16, %s19
        $region32: #{tpu_custom_call.1} parent=27 // pred_fallthru
          _
        // Predicated region
        $region33: #{tpu_custom_call.1} parent=27 // pred_check
          %p581 = pneg %p110
        $region34: #{tpu_custom_call.1} parent=27 // pred_check_branch
          %583 = sbr.rel (%p581) target = $region36
        $region35: #{tpu_custom_call.1} parent=27 // pred_region
          %s584 = smul.u32 16, %s19
        $region36: #{tpu_custom_call.1} parent=27 // pred_fallthru
          _
        // Predicated region
        $region37: #{tpu_custom_call.1} parent=27 // pred_check
          %p585 = pneg %p136
        $region38: #{tpu_custom_call.1} parent=27 // pred_check_branch
          %587 = sbr.rel (%p585) target = $region40
        $region39: #{tpu_custom_call.1} parent=27 // pred_region
          %589 = vsyncadd %s573, 0
          %s590 = smul.addr %s19, 2
          %s591 = scalar_lea.hbm %s4, %s590
          %s593 = sshll.u32 %s576, 4
          %s594 = int_to_ptr.vmem [resolvable:$true] %s593
          %s595 = sshll.u32 %s591, 4
          %s596 = int_to_ptr.hbm [resolvable:$true] %s595
          %598 = dma.vmem_to_hbm [thread:$0]  %s594, 32, %s596, %s573
        $region40: #{tpu_custom_call.1} parent=27 // pred_fallthru
          _
      $region28: #{tpu_custom_call.1} parent=5 // pred_fallthru
        _
      %p599 = scmp.le.s32.totalorder 2, %s14
      // Predicated region
      $region41: #{tpu_custom_call.1} parent=5 // pred_check
        %p600 = pneg %p599
      $region42: #{tpu_custom_call.1} parent=5 // pred_check_branch
        %602 = sbr.rel (%p600) target = $region44
      $region43: #{tpu_custom_call.1} parent=5 // pred_region
        %s603 = ssub.s32 %s14, 2
        // Predicated region
        $region45: #{tpu_custom_call.1} parent=43 // pred_check
          %p604 = pneg %p90
        $region46: #{tpu_custom_call.1} parent=43 // pred_check_branch
          %606 = sbr.rel (%p604) target = $region48
        $region47: #{tpu_custom_call.1} parent=43 // pred_region
          %s607 = smul.u32 16, %s20
          %p608 = scmp.lt.s32.totalorder %s607, 31
          %s609 = scalar_select %p608, %s607, 31
          %s610 = smul.addr %s609, 8
          %s611 = scalar_lea.vmem %s2, %s610
        $region48: #{tpu_custom_call.1} parent=43 // pred_fallthru
          _
        // Predicated region
        $region49: #{tpu_custom_call.1} parent=43 // pred_check
          %p612 = pneg %p116
        $region50: #{tpu_custom_call.1} parent=43 // pred_check_branch
          %614 = sbr.rel (%p612) target = $region52
        $region51: #{tpu_custom_call.1} parent=43 // pred_region
          %s615 = smul.u32 16, %s20
          %p616 = scmp.lt.s32.totalorder %s615, 31
          %s617 = scalar_select %p616, %s615, 31
          %s618 = smul.addr %s617, 8
          %s619 = scalar_lea.vmem %s3, %s618
        $region52: #{tpu_custom_call.1} parent=43 // pred_fallthru
          _
        // Predicated region
        $region53: #{tpu_custom_call.1} parent=43 // pred_check
          %p620 = pneg %p142
        $region54: #{tpu_custom_call.1} parent=43 // pred_check_branch
          %622 = sbr.rel (%p620) target = $region56
        $region55: #{tpu_custom_call.1} parent=43 // pred_region
          %s623 = sand.u32 %s127, 1
          %s624 = scalar_lea.sflag [#allocation3], %s623
          %s625 = sand.u32 %s127, 1
          %s626 = smul.addr %s625, 2
          %s627 = scalar_lea.vmem [#allocation2], %s626
          %629 = dma.done %s624, 32
        $region56: #{tpu_custom_call.1} parent=43 // pred_fallthru
          _
      $region44: #{tpu_custom_call.1} parent=5 // pred_fallthru
        _
    $region6: #{tpu_custom_call.1} parent=1 // loop_footer
      %s18 = sadd.s32 1, %s14
    $region7: #{tpu_custom_call.1} parent=1 // loop_footer_branch
      %13 = sbr.rel target = $region3
    $region8: #{tpu_custom_call.1} parent=1 // loop_exit
      _
    %630 = vsyncpa [#allocation3], 1
    %s631 = scalar_lea.sflag [#allocation3], 1
    %632 = vsyncpa %s631, 1

</llo_original>
